<compile_context>
chip_gen: v5e
topology: v5e:2x2
jax: 0.10.0
libtpu: 0.0.40
codegen_flags: <defaults>
</compile_context>

<pallas_src>
import functools

import jax
import jax.numpy as jnp
from jax.experimental import pallas as pl
from jax.experimental.pallas import tpu as pltpu

BN_EPS = 1e-5


def _round_up(x, m):
    return (x + m - 1) // m * m


def _pad2(a, rows, cols):
    r, c = a.shape
    if r == rows and c == cols:
        return a
    return jnp.pad(a, ((0, rows - r), (0, cols - c)))


def _vmem_capacity_bytes():
    try:
        return int(pltpu.get_tpu_info().vmem_capacity_bytes)
    except Exception:
        return 64 << 20  # conservative (v7x-sized) fallback


def _vmem_limit(working_set_bytes):
    cap = _vmem_capacity_bytes()
    hard_cap = max(16 << 20, (cap * 3) // 4)      # leave headroom for compiler scratch
    want = (working_set_bytes * 3) // 2 + (2 << 20)
    return int(min(max(want, 16 << 20), hard_cap))


# ---------------------------------------------------------------------------
# Kernel 1: hidden = ReLU(BatchNorm_train(x @ W1)) over one D1 tile.
# ---------------------------------------------------------------------------
def hidden_kernel(x_ref, w1_ref, gamma_ref, beta_ref, h_ref, *, inv_b):
    # Linear-1 (bias cancels under train-mode BN): bf16 MXU operands, f32 acc.
    h = jnp.dot(x_ref[...], w1_ref[...], preferred_element_type=jnp.float32)

    # Exact train-mode batch stats: batch axis fully resident, features tiled.
    # Zero-padded batch rows contribute nothing because we scale by 1/B_real.
    s = jnp.sum(h, axis=0, keepdims=True)
    ss = jnp.sum(h * h, axis=0, keepdims=True)
    mean = s * inv_b
    var = jnp.maximum(ss * inv_b - mean * mean, 0.0)   # clamp: cancellation can go < 0

    # Fold the BN affine into per-feature scale/shift (O(tk) precompute,
    # 2 VALU ops/element apply; rsqrt goes to the EUP slot).
    scale = gamma_ref[...] * jax.lax.rsqrt(var + BN_EPS)
    shift = beta_ref[...] - mean * scale
    h_ref[...] = jnp.maximum(h * scale + shift, 0.0).astype(h_ref.dtype)


# ---------------------------------------------------------------------------
# Kernel 2: out = hidden @ W2 + b2  (tiled matmul, K=D1 reduction axis last).
# ---------------------------------------------------------------------------
def output_kernel(h_ref, w2_ref, b2_ref, o_ref, acc_ref):
    k = pl.program_id(1)

    @pl.when(k == 0)
    def _():
        acc_ref[...] = jnp.zeros_like(acc_ref)

    acc_ref[...] += jnp.dot(h_ref[...], w2_ref[...],
                            preferred_element_type=jnp.float32)

    @pl.when(k == pl.num_programs(1) - 1)
    def _():
        o_ref[...] = (acc_ref[...] + b2_ref[...]).astype(o_ref.dtype)


# ---------------------------------------------------------------------------
# Host-side wrappers
# ---------------------------------------------------------------------------
def prepare_params(params, *, tk=256, tn_max=512):
    """Pad + bf16-cast the weights ONCE (hoisted out of the per-call hot path).

    tk: shared D1 tile (kernel-1 output tile / kernel-2 reduction tile).
        Use tk=128 (and tn_max=256) on v5e to match its 4x128x128 MXU.
    """
    w1, b1, gamma, beta, w2, b2 = params
    del b1  # Linear-1 bias cancels exactly under train-mode BatchNorm.
    D0, D1 = w1.shape
    D2 = w2.shape[1]

    D0p = _round_up(D0, 128)
    tk = min(tk, _round_up(D1, 128))
    D1p = _round_up(D1, tk)

    d2_128 = _round_up(D2, 128)
    tn = min(tn_max, d2_128)
    if d2_128 > 128 and d2_128 // tn < 2:
        # Keep >= 2 output tiles so the "parallel" N axis feeds both v7x cores.
        tn = _round_up(pl.cdiv(d2_128, 2), 128)
    D2p = _round_up(d2_128, tn)

    return dict(
        w1=_pad2(w1, D0p, D1p).astype(jnp.bfloat16),
        gamma=_pad2(gamma.reshape(1, D1), 1, D1p).astype(jnp.float32),
        beta=_pad2(beta.reshape(1, D1), 1, D1p).astype(jnp.float32),
        w2=_pad2(w2, D1p, D2p).astype(jnp.bfloat16),
        b2=_pad2(b2.reshape(1, D2), 1, D2p).astype(jnp.float32),
        dims=(D0, D1, D2, D0p, D1p, D2p, tk, tn),
    )


def projector_forward(x, prepared):
    """x: (B, D0) f32. prepared: output of prepare_params. Returns (B, D2)."""
    D0, D1, D2, D0p, D1p, D2p, tk, tn = prepared["dims"]
    B = x.shape[0]
    Bp = _round_up(B, 8)
    # Zero-padded rows keep the sum-based BN stats exact (scaled by 1/B_real).
    xp = _pad2(x, Bp, D0p).astype(jnp.bfloat16)

    # ---- Kernel 1: hidden; grid over D1 tiles (parallel). W1 read once. ----
    # x has a constant block index; we still budget 2 buffers for it.
    # TODO(synk): if Bp*D0p ever outgrows the VMEM budget (v7x, 64 MiB), tile
    # the batch with a two-pass BN (accumulate per-feature sum/sumsq first)
    # instead of keeping the whole batch resident.
    vmem1 = (2 * Bp * D0p * 2          # resident x (double-buffered by default)
             + 2 * D0p * tk * 2        # W1 tile
             + 2 * 2 * tk * 4          # gamma / beta tiles
             + 2 * Bp * tk * 2)        # hidden output tile
    hidden = pl.pallas_call(
        functools.partial(hidden_kernel, inv_b=float(1.0 / B)),
        out_shape=jax.ShapeDtypeStruct((Bp, D1p), jnp.bfloat16),
        grid_spec=pltpu.PrefetchScalarGridSpec(
            num_scalar_prefetch=0,
            grid=(D1p // tk,),
            in_specs=[
                pl.BlockSpec((Bp, D0p), lambda j: (0, 0)),   # x (resident)
                pl.BlockSpec((D0p, tk), lambda j: (0, j)),   # W1 slice
                pl.BlockSpec((1, tk), lambda j: (0, j)),     # gamma slice
                pl.BlockSpec((1, tk), lambda j: (0, j)),     # beta slice
            ],
            out_specs=pl.BlockSpec((Bp, tk), lambda j: (0, j)),
        ),
        compiler_params=pltpu.CompilerParams(
            dimension_semantics=("parallel",),
            vmem_limit_bytes=_vmem_limit(vmem1),
        ),
    )(xp, prepared["w1"], prepared["gamma"], prepared["beta"])

    # ---- Kernel 2: out = hidden @ W2 + b2; (N parallel, K=D1 reduction last).
    vmem2 = (2 * Bp * tk * 2           # hidden tile
             + 2 * tk * tn * 2         # W2 tile
             + 2 * tn * 4              # b2 tile
             + 2 * Bp * tn * x.dtype.itemsize   # output tile
             + Bp * tn * 4)            # f32 accumulator scratch
    out = pl.pallas_call(
        output_kernel,
        out_shape=jax.ShapeDtypeStruct((Bp, D2p), x.dtype),
        grid_spec=pltpu.PrefetchScalarGridSpec(
            num_scalar_prefetch=0,
            grid=(D2p // tn, D1p // tk),
            in_specs=[
                pl.BlockSpec((Bp, tk), lambda n, k: (0, k)),   # hidden slice
                pl.BlockSpec((tk, tn), lambda n, k: (k, n)),   # W2 slice
                pl.BlockSpec((1, tn), lambda n, k: (0, n)),    # b2 slice
            ],
            out_specs=pl.BlockSpec((Bp, tn), lambda n, k: (0, n)),
            scratch_shapes=[pltpu.VMEM((Bp, tn), jnp.float32)],
        ),
        compiler_params=pltpu.CompilerParams(
            dimension_semantics=("parallel", "arbitrary"),
            vmem_limit_bytes=_vmem_limit(vmem2),
        ),
    )(hidden, prepared["w2"], prepared["b2"])

    return out[:B, :D2]


# ---------------------------------------------------------------------------
# Parameter init + references
# ---------------------------------------------------------------------------
def init_params(key, d0, d1, d2):
    k1, k2, k3, k4 = jax.random.split(key, 4)
    # PyTorch Linear default init: U(-1/sqrt(fan_in), 1/sqrt(fan_in))
    lim1 = 1.0 / jnp.sqrt(d0)
    lim2 = 1.0 / jnp.sqrt(d1)
    w1 = jax.random.uniform(k1, (d0, d1), jnp.float32, -lim1, lim1)
    b1 = jax.random.uniform(k2, (1, d1), jnp.float32, -lim1, lim1)  # cancels in kernel
    gamma = jnp.ones((1, d1), jnp.float32)    # BatchNorm1d default weight
    beta = jnp.zeros((1, d1), jnp.float32)    # BatchNorm1d default bias
    w2 = jax.random.uniform(k3, (d1, d2), jnp.float32, -lim2, lim2)
    b2 = jax.random.uniform(k4, (1, d2), jnp.float32, -lim2, lim2)
    return (w1, b1, gamma, beta, w2, b2)


def projector_ref(x, params):
    """Pure-f32 reference with exact PyTorch train-mode semantics (incl. b1)."""
    w1, b1, gamma, beta, w2, b2 = params
    h = x @ w1 + b1
    mean = jnp.mean(h, axis=0, keepdims=True)
    var = jnp.mean((h - mean) ** 2, axis=0, keepdims=True)
    h = (h - mean) * jax.lax.rsqrt(var + BN_EPS) * gamma + beta
    h = jnp.maximum(h, 0.0)
    return h @ w2 + b2


def projector_ref_bf16(x, params):
    """Reference mirroring the kernel's bf16-operand / f32-accumulate numerics."""
    w1, b1, gamma, beta, w2, b2 = params
    bf = lambda a: a.astype(jnp.bfloat16)
    h = jnp.dot(bf(x), bf(w1), preferred_element_type=jnp.float32)  # b1 cancels in BN
    mean = jnp.mean(h, axis=0, keepdims=True)
    var = jnp.maximum(jnp.mean(h * h, axis=0, keepdims=True) - mean * mean, 0.0)
    scale = gamma * jax.lax.rsqrt(var + BN_EPS)
    shift = beta - mean * scale
    h = jnp.maximum(h * scale + shift, 0.0)
    return jnp.dot(bf(h), bf(w2), preferred_element_type=jnp.float32) + b2


if __name__ == "__main__":
    key = jax.random.PRNGKey(0)
    kx, kp = jax.random.split(key)

    # Small but lane-dense demo shapes: two D1 tiles (pipelined reduction),
    # two output-N tiles (parallel axis has work for both v7x cores).
    B, D0, D1, D2 = 16, 128, 512, 256
    x = jax.random.normal(kx, (B, D0), jnp.float32)
    params = init_params(kp, D0, D1, D2)

    prepared = prepare_params(params)            # pad + bf16 cast, once
    out = jax.block_until_ready(projector_forward(x, prepared))
    assert out.shape == (B, D2)

    ref_bf16 = projector_ref_bf16(x, params)     # same numerics as the kernels
    ref_f32 = projector_ref(x, params)           # exact PyTorch train-mode math
    assert jnp.allclose(out, ref_bf16, atol=5e-3, rtol=5e-3), "mismatch vs bf16 reference"
    assert jnp.allclose(out, ref_f32, atol=5e-2, rtol=5e-2), "mismatch vs f32 reference"

    print("KERNEL_OK")
</pallas_src>

<mosaic_0001>
module attributes {stable_mosaic.version = 11 : i64} {
  func.func @hidden_kernel(%arg0: i32, %arg1: memref<16x128xbf16, #tpu.memory_space<vmem>>, %arg2: memref<128x256xbf16, #tpu.memory_space<vmem>>, %arg3: memref<1x256xf32, #tpu.memory_space<vmem>>, %arg4: memref<1x256xf32, #tpu.memory_space<vmem>>, %arg5: memref<16x256xbf16, #tpu.memory_space<vmem>>) attributes {dimension_semantics = [#tpu.dimension_semantics<parallel>], iteration_bounds = array<i64: 2>, scalar_prefetch = 0 : i64, scratch_operands = 0 : i64, tpu.core_type = #tpu.core_type<tc>, window_params = [{pipeline_mode = #tpu.pipeline_mode<synchronous>, transform_indices = @transform_0, window_bounds = array<i64: 16, 128>}, {transform_indices = @transform_1, window_bounds = array<i64: 128, 256>}, {transform_indices = @transform_2, window_bounds = array<i64: 1, 256>}, {transform_indices = @transform_3, window_bounds = array<i64: 1, 256>}, {transform_indices = @transform_4, window_bounds = array<i64: 16, 256>}]} {
    %c0 = arith.constant 0 : index
    %c0_0 = arith.constant 0 : index
    %0 = vector.load %arg1[%c0, %c0_0] : memref<16x128xbf16, #tpu.memory_space<vmem>>, vector<16x128xbf16>
    %c0_1 = arith.constant 0 : index
    %c0_2 = arith.constant 0 : index
    %1 = vector.load %arg2[%c0_1, %c0_2] : memref<128x256xbf16, #tpu.memory_space<vmem>>, vector<128x256xbf16>
    %cst = arith.constant dense<0.000000e+00> : vector<16x256xf32>
    %2 = tpu.matmul %0, %1, %cst {dimension_numbers = #tpu.dot_dimension_numbers<[1], [0], [0], [1], [0, 0, 1, 1], [], []>} : vector<16x128xbf16>, vector<128x256xbf16>, vector<16x256xf32> -> vector<16x256xf32>
    %cst_3 = arith.constant dense<0.000000e+00> : vector<256xf32>
    %3 = vector.multi_reduction <add>, %2, %cst_3 [0] : vector<16x256xf32> to vector<256xf32>
    %4 = vector.shape_cast %3 : vector<256xf32> to vector<1x256xf32>
    %5 = arith.mulf %2, %2 : vector<16x256xf32>
    %cst_4 = arith.constant dense<0.000000e+00> : vector<256xf32>
    %6 = vector.multi_reduction <add>, %5, %cst_4 [0] : vector<16x256xf32> to vector<256xf32>
    %7 = vector.shape_cast %6 : vector<256xf32> to vector<1x256xf32>
    %cst_5 = arith.constant 6.250000e-02 : f32
    %8 = vector.broadcast %cst_5 : f32 to vector<1x256xf32>
    %9 = arith.mulf %4, %8 : vector<1x256xf32>
    %cst_6 = arith.constant 6.250000e-02 : f32
    %10 = vector.broadcast %cst_6 : f32 to vector<1x256xf32>
    %11 = arith.mulf %7, %10 : vector<1x256xf32>
    %12 = arith.mulf %9, %9 : vector<1x256xf32>
    %13 = arith.subf %11, %12 : vector<1x256xf32>
    %cst_7 = arith.constant 0.000000e+00 : f32
    %14 = vector.broadcast %cst_7 : f32 to vector<1x256xf32>
    %15 = arith.maximumf %13, %14 : vector<1x256xf32>
    %c0_8 = arith.constant 0 : index
    %c0_9 = arith.constant 0 : index
    %16 = vector.load %arg3[%c0_8, %c0_9] : memref<1x256xf32, #tpu.memory_space<vmem>>, vector<1x256xf32>
    %cst_10 = arith.constant 9.99999974E-6 : f32
    %17 = vector.broadcast %cst_10 : f32 to vector<1x256xf32>
    %18 = arith.addf %15, %17 : vector<1x256xf32>
    %19 = math.rsqrt %18 : vector<1x256xf32>
    %20 = arith.mulf %16, %19 : vector<1x256xf32>
    %c0_11 = arith.constant 0 : index
    %c0_12 = arith.constant 0 : index
    %21 = vector.load %arg4[%c0_11, %c0_12] : memref<1x256xf32, #tpu.memory_space<vmem>>, vector<1x256xf32>
    %22 = arith.mulf %9, %20 : vector<1x256xf32>
    %23 = arith.subf %21, %22 : vector<1x256xf32>
    %24 = vector.broadcast %20 : vector<1x256xf32> to vector<16x256xf32>
    %25 = arith.mulf %2, %24 : vector<16x256xf32>
    %26 = vector.broadcast %23 : vector<1x256xf32> to vector<16x256xf32>
    %27 = arith.addf %25, %26 : vector<16x256xf32>
    %cst_13 = arith.constant 0.000000e+00 : f32
    %28 = vector.broadcast %cst_13 : f32 to vector<16x256xf32>
    %29 = arith.maximumf %27, %28 : vector<16x256xf32>
    %30 = arith.truncf %29 : vector<16x256xf32> to vector<16x256xbf16>
    %c0_14 = arith.constant 0 : index
    %c0_15 = arith.constant 0 : index
    %31 = vector.load %arg5[%c0_14, %c0_15] : memref<16x256xbf16, #tpu.memory_space<vmem>>, vector<16x256xbf16>
    tpu.vector_store %arg5[%c0_14, %c0_15], %30 {strides = array<i32>} : memref<16x256xbf16, #tpu.memory_space<vmem>>, vector<16x256xbf16>,
    return
  }
  func.func @transform_0(%arg0: i32) -> (i32, i32) {
    %c0_i32 = arith.constant 0 : i32
    %c0_i32_0 = arith.constant 0 : i32
    %c0_i32_1 = arith.constant 0 : i32
    return %c0_i32, %c0_i32_0 : i32, i32
  }
  func.func @transform_1(%arg0: i32) -> (i32, i32) {
    %c0_i32 = arith.constant 0 : i32
    %c0_i32_0 = arith.constant 0 : i32
    return %c0_i32, %arg0 : i32, i32
  }
  func.func @transform_2(%arg0: i32) -> (i32, i32) {
    %c0_i32 = arith.constant 0 : i32
    %c0_i32_0 = arith.constant 0 : i32
    return %c0_i32, %arg0 : i32, i32
  }
  func.func @transform_3(%arg0: i32) -> (i32, i32) {
    %c0_i32 = arith.constant 0 : i32
    %c0_i32_0 = arith.constant 0 : i32
    return %c0_i32, %arg0 : i32, i32
  }
  func.func @transform_4(%arg0: i32) -> (i32, i32) {
    %c0_i32 = arith.constant 0 : i32
    %c0_i32_0 = arith.constant 0 : i32
    return %c0_i32, %arg0 : i32, i32
  }
}

</mosaic_0001>

<llo_original>
// kernel: tpu_custom_call.1
$region0: #{tpu_custom_call.1}
  #allocation0 [shape = 'u32[]', space=smem, size = 0x4, offset = 0x4, fixed_abs, tag = 'smem constant byte address 0x4 - core index']
  #allocation1 [shape = 'u32[72,128]{1,0:T(1,128)}', space=vmem, size = 0x9000, scoped, tag = 'internal scratch']
  %s0 = inlined_call_operand.hbm [shape: bf16[16,128], index: 0, kind: input, shape index: {}]
  %s1 = inlined_call_operand.hbm [shape: bf16[128,512], index: 1, kind: input, shape index: {}]
  %s2 = inlined_call_operand.hbm [shape: f32[1,512], index: 2, kind: input, shape index: {}]
  %s3 = inlined_call_operand.hbm [shape: f32[1,512], index: 3, kind: input, shape index: {}]
  %s4 = inlined_call_operand.hbm [shape: bf16[16,512], index: 4, kind: output, shape index: {}]
  %s5 = sld [smem:[#allocation0]]
  $region65: #{tpu_custom_call.1} parent=0
    _
  %s7 = ssub.s32 1, %s5
  %s8 = scalar_select 0, %s7, %s5
  $region1: #{tpu_custom_call.1} parent=0
    #allocation2 [shape = 'u8[4096]{0}', space=vmem, size = 0x1000, scoped, tag = 'input window, operand 0, single buffered']
    #allocation3 [shape = 's32[2]{0}', space=sflag, size = 0x8, scoped, tag = 'scoped memory for tpu_custom_call.1']
    #allocation4 [shape = 's32[2]{0}', space=sflag, size = 0x8, scoped, tag = 'scoped memory for tpu_custom_call.1']
    #allocation5 [shape = 'u8[131072]{0}', space=vmem, size = 0x20000, scoped, tag = 'input window, operand 1']
    #allocation6 [shape = 's32[2]{0}', space=sflag, size = 0x8, scoped, tag = 'scoped memory for tpu_custom_call.1']
    #allocation7 [shape = 'u8[2048]{0}', space=vmem, size = 0x800, scoped, tag = 'input window, operand 2']
    #allocation8 [shape = 'u8[2048]{0}', space=vmem, size = 0x800, scoped, tag = 'input window, operand 3']
    #allocation9 [shape = 's32[2]{0}', space=sflag, size = 0x8, scoped, tag = 'scoped memory for tpu_custom_call.1']
    #allocation10 [shape = 'u8[16384]{0}', space=vmem, size = 0x4000, scoped, tag = 'output window, operand 0']
    %9 = vsyncpa [#allocation3], 0
    %10 = vsyncpa [#allocation6], 0
    %s11 = scalar_lea.sflag [#allocation6], 1
    %12 = vsyncpa %s11, 0
    %13 = vsyncpa [#allocation9], 0
    %s14 = scalar_lea.sflag [#allocation9], 1
    %15 = vsyncpa %s14, 0
    %16 = vsyncpa [#allocation4], 0
    %s17 = scalar_lea.sflag [#allocation4], 1
    %18 = vsyncpa %s17, 0
    loop: start=0, step=1, limit=4
    $region2: #{tpu_custom_call.1} parent=1 // loop_pre_header
      _
    $region3: #{tpu_custom_call.1} parent=1 // loop_header
      %s20 = sphi 0, %s24
      %p21 = scmp.ge.s32.totalorder %s20, 4
      %s28 = sphi 0, %s28
      %s30 = sphi 0, %s28
      %s31 = sphi 0, %s30
      %s45 = sphi 0, %s31
      %s51 = sphi 0, %s53
      %s54 = sphi 0, %s51
      %s55 = sphi 0, %s54
      %s71 = sphi 0, %s55
      %s77 = sphi 0, %s79
      %s80 = sphi 0, %s77
      %s81 = sphi 0, %s80
      %s97 = sphi 0, %s81
      %s103 = sphi 0, %s105
      %s106 = sphi 0, %s103
      %s107 = sphi 0, %s106
      %s123 = sphi 0, %s107
      %s129 = sphi 0, %s131
      %s132 = sphi 0, %s129
      %s133 = sphi 0, %s132
      %s149 = sphi 0, %s133
    $region4: #{tpu_custom_call.1} parent=1 // loop_header_branch
      %23 = sbr.rel (%p21) target = $region8
    $region5: #{tpu_custom_call.1} parent=1 // loop_body
      %s25 = ssub.s32 %s20, 1
      %s26 = ssub.s32 %s20, 2
      %s27 = sadd.s32 %s20, 1
      %s29 = sadd.s32 %s28, 1
      %p32 = scmp.eq.s32.totalorder %s20, 1
      %p33 = scmp.ne.s32.totalorder %s28, %s30
      %p34 = scmp.eq.s32.totalorder %s20, 0
      %p35 = por %p33, %p34
      %p36 = scmp.ne.s32.totalorder %s28, %s30
      %p37 = scmp.eq.s32.totalorder %s25, 1
      %p38 = por %p36, %p37
      %p39 = scmp.ne.s32.totalorder %s30, %s31
      %p40 = scmp.eq.s32.totalorder %s25, 0
      %p41 = por %p39, %p40
      %p42 = scmp.ne.s32.totalorder %s30, %s31
      %p43 = scmp.eq.s32.totalorder %s26, 1
      %p44 = por %p42, %p43
      %p46 = scmp.ne.s32.totalorder %s31, %s45
      %p47 = scmp.eq.s32.totalorder %s26, 0
      %p48 = por %p46, %p47
      %s49 = ssub.s32 %s20, %s27
      %p50 = scmp.eq.s32.totalorder %s49, 0
      %s52 = sadd.s32 %s51, 1
      %s53 = scalar_select %p50, %s51, %s52
      %p56 = pneg %p50
      %p57 = scmp.eq.s32.totalorder %s20, 1
      %p58 = por %p56, %p57
      %p59 = scmp.ne.s32.totalorder %s51, %s54
      %p60 = scmp.eq.s32.totalorder %s20, 0
      %p61 = por %p59, %p60
      %p62 = scmp.ne.s32.totalorder %s51, %s54
      %p63 = scmp.eq.s32.totalorder %s25, 1
      %p64 = por %p62, %p63
      %p65 = scmp.ne.s32.totalorder %s54, %s55
      %p66 = scmp.eq.s32.totalorder %s25, 0
      %p67 = por %p65, %p66
      %p68 = scmp.ne.s32.totalorder %s54, %s55
      %p69 = scmp.eq.s32.totalorder %s26, 1
      %p70 = por %p68, %p69
      %p72 = scmp.ne.s32.totalorder %s55, %s71
      %p73 = scmp.eq.s32.totalorder %s26, 0
      %p74 = por %p72, %p73
      %s75 = ssub.s32 %s20, %s27
      %p76 = scmp.eq.s32.totalorder %s75, 0
      %s78 = sadd.s32 %s77, 1
      %s79 = scalar_select %p76, %s77, %s78
      %p82 = pneg %p76
      %p83 = scmp.eq.s32.totalorder %s20, 1
      %p84 = por %p82, %p83
      %p85 = scmp.ne.s32.totalorder %s77, %s80
      %p86 = scmp.eq.s32.totalorder %s20, 0
      %p87 = por %p85, %p86
      %p88 = scmp.ne.s32.totalorder %s77, %s80
      %p89 = scmp.eq.s32.totalorder %s25, 1
      %p90 = por %p88, %p89
      %p91 = scmp.ne.s32.totalorder %s80, %s81
      %p92 = scmp.eq.s32.totalorder %s25, 0
      %p93 = por %p91, %p92
      %p94 = scmp.ne.s32.totalorder %s80, %s81
      %p95 = scmp.eq.s32.totalorder %s26, 1
      %p96 = por %p94, %p95
      %p98 = scmp.ne.s32.totalorder %s81, %s97
      %p99 = scmp.eq.s32.totalorder %s26, 0
      %p100 = por %p98, %p99
      %s101 = ssub.s32 %s20, %s27
      %p102 = scmp.eq.s32.totalorder %s101, 0
      %s104 = sadd.s32 %s103, 1
      %s105 = scalar_select %p102, %s103, %s104
      %p108 = pneg %p102
      %p109 = scmp.eq.s32.totalorder %s20, 1
      %p110 = por %p108, %p109
      %p111 = scmp.ne.s32.totalorder %s103, %s106
      %p112 = scmp.eq.s32.totalorder %s20, 0
      %p113 = por %p111, %p112
      %p114 = scmp.ne.s32.totalorder %s103, %s106
      %p115 = scmp.eq.s32.totalorder %s25, 1
      %p116 = por %p114, %p115
      %p117 = scmp.ne.s32.totalorder %s106, %s107
      %p118 = scmp.eq.s32.totalorder %s25, 0
      %p119 = por %p117, %p118
      %p120 = scmp.ne.s32.totalorder %s106, %s107
      %p121 = scmp.eq.s32.totalorder %s26, 1
      %p122 = por %p120, %p121
      %p124 = scmp.ne.s32.totalorder %s107, %s123
      %p125 = scmp.eq.s32.totalorder %s26, 0
      %p126 = por %p124, %p125
      %s127 = ssub.s32 %s20, %s27
      %p128 = scmp.eq.s32.totalorder %s127, 0
      %s130 = sadd.s32 %s129, 1
      %s131 = scalar_select %p128, %s129, %s130
      %p134 = pneg %p128
      %p135 = scmp.eq.s32.totalorder %s20, 1
      %p136 = por %p134, %p135
      %p137 = scmp.ne.s32.totalorder %s129, %s132
      %p138 = scmp.eq.s32.totalorder %s20, 0
      %p139 = por %p137, %p138
      %p140 = scmp.ne.s32.totalorder %s129, %s132
      %p141 = scmp.eq.s32.totalorder %s25, 1
      %p142 = por %p140, %p141
      %p143 = scmp.ne.s32.totalorder %s132, %s133
      %p144 = scmp.eq.s32.totalorder %s25, 0
      %p145 = por %p143, %p144
      %p146 = scmp.ne.s32.totalorder %s132, %s133
      %p147 = scmp.eq.s32.totalorder %s26, 1
      %p148 = por %p146, %p147
      %p150 = scmp.ne.s32.totalorder %s133, %s149
      %p151 = scmp.eq.s32.totalorder %s26, 0
      %p152 = por %p150, %p151
      %p153 = scmp.le.s32.totalorder 1, %s20
      %p154 = scmp.lt.s32.totalorder %s20, 3
      %p155 = pnand %p153, %p154
      %p156 = pneg %p155
      // Predicated region
      $region9: #{tpu_custom_call.1} parent=5 // pred_check
        _
      $region10: #{tpu_custom_call.1} parent=5 // pred_check_branch
        %158 = sbr.rel (%p155) target = $region12
      $region11: #{tpu_custom_call.1} parent=5 // pred_region
        %s159 = ssub.s32 %s20, 1
        // Predicated region
        $region13: #{tpu_custom_call.1} parent=11 // pred_check
          %p160 = pneg %p41
        $region14: #{tpu_custom_call.1} parent=11 // pred_check_branch
          %162 = sbr.rel (%p160) target = $region16
        $region15: #{tpu_custom_call.1} parent=11 // pred_region
          %164 = vsyncadd [#allocation3], 0
          %s165 = sshll.u32 %s0, 4
          %s166 = int_to_ptr.hbm [resolvable:$true] %s165
          %s167 = sshll.u32 [#allocation2], 4
          %s168 = int_to_ptr.vmem [resolvable:$true] %s167
          %173 = dma.hbm_to_vmem [thread:$0]  %s166, 128, %s168, [#allocation3], 64, 64, 4
        $region16: #{tpu_custom_call.1} parent=11 // pred_fallthru
          _
      $region12: #{tpu_custom_call.1} parent=5 // pred_fallthru
        _
      %p174 = scmp.lt.s32.totalorder %s20, 2
      // Predicated region
      $region17: #{tpu_custom_call.1} parent=5 // pred_check
        %p175 = pneg %p174
      $region18: #{tpu_custom_call.1} parent=5 // pred_check_branch
        %177 = sbr.rel (%p175) target = $region20
      $region19: #{tpu_custom_call.1} parent=5 // pred_region
        // Predicated region
        $region21: #{tpu_custom_call.1} parent=19 // pred_check
          %p178 = pneg %p61
        $region22: #{tpu_custom_call.1} parent=19 // pred_check_branch
          %180 = sbr.rel (%p178) target = $region24
        $region23: #{tpu_custom_call.1} parent=19 // pred_region
          %s181 = sand.u32 %s20, 1
          %s182 = scalar_lea.sflag [#allocation6], %s181
          %s183 = sand.u32 %s51, 1
          %s184 = smul.addr %s183, 128
          %s185 = scalar_lea.vmem [#allocation5], %s184
          %s186 = smul.u32 2, %s20
          %188 = vsyncadd %s182, 0
          %s189 = smul.addr %s186, 4
          %s190 = scalar_lea.hbm %s1, %s189
          %s191 = sshll.u32 %s190, 4
          %s192 = int_to_ptr.hbm [resolvable:$true] %s191
          %s193 = sshll.u32 %s185, 4
          %s194 = int_to_ptr.vmem [resolvable:$true] %s193
          %199 = dma.hbm_to_vmem [thread:$0]  %s192, 2048, %s194, %s182, 256, 128, 8
        $region24: #{tpu_custom_call.1} parent=19 // pred_fallthru
          _
        // Predicated region
        $region25: #{tpu_custom_call.1} parent=19 // pred_check
          %p200 = pneg %p87
        $region26: #{tpu_custom_call.1} parent=19 // pred_check_branch
          %202 = sbr.rel (%p200) target = $region28
        $region27: #{tpu_custom_call.1} parent=19 // pred_region
          %s203 = sand.u32 %s20, 1
          %s204 = scalar_lea.sflag [#allocation6], %s203
          %s205 = sand.u32 %s77, 1
          %s206 = smul.addr %s205, 2
          %s207 = scalar_lea.vmem [#allocation7], %s206
          %s208 = smul.u32 2, %s20
          %210 = vsyncadd %s204, 0
          %s211 = scalar_lea.hbm %s2, %s208
          %s213 = sshll.u32 %s211, 4
          %s214 = int_to_ptr.hbm [resolvable:$true] %s213
          %s215 = sshll.u32 %s207, 4
          %s216 = int_to_ptr.vmem [resolvable:$true] %s215
          %218 = dma.hbm_to_vmem [thread:$0]  %s214, 32, %s216, %s204
        $region28: #{tpu_custom_call.1} parent=19 // pred_fallthru
          _
        // Predicated region
        $region29: #{tpu_custom_call.1} parent=19 // pred_check
          %p219 = pneg %p113
        $region30: #{tpu_custom_call.1} parent=19 // pred_check_branch
          %221 = sbr.rel (%p219) target = $region32
        $region31: #{tpu_custom_call.1} parent=19 // pred_region
          %s222 = sand.u32 %s103, 1
          %s223 = scalar_lea.sflag [#allocation9], %s222
          %s224 = sand.u32 %s103, 1
          %s225 = smul.addr %s224, 2
          %s226 = scalar_lea.vmem [#allocation8], %s225
          %s227 = smul.u32 2, %s20
          %229 = vsyncadd %s223, 0
          %s230 = scalar_lea.hbm %s3, %s227
          %s232 = sshll.u32 %s230, 4
          %s233 = int_to_ptr.hbm [resolvable:$true] %s232
          %s234 = sshll.u32 %s226, 4
          %s235 = int_to_ptr.vmem [resolvable:$true] %s234
          %237 = dma.hbm_to_vmem [thread:$0]  %s233, 32, %s235, %s223
        $region32: #{tpu_custom_call.1} parent=19 // pred_fallthru
          _
      $region20: #{tpu_custom_call.1} parent=5 // pred_fallthru
        _
      %p238 = scmp.le.s32.totalorder 1, %s20
      %p239 = scmp.lt.s32.totalorder %s20, 3
      %p240 = pnand %p238, %p239
      %p241 = pneg %p240
      // Predicated region
      $region33: #{tpu_custom_call.1} parent=5 // pred_check
        _
      $region34: #{tpu_custom_call.1} parent=5 // pred_check_branch
        %243 = sbr.rel (%p240) target = $region36
      $region35: #{tpu_custom_call.1} parent=5 // pred_region
        %s244 = ssub.s32 %s20, 1
        // Predicated region
        $region37: #{tpu_custom_call.1} parent=35 // pred_check
          %p245 = pneg %p41
        $region38: #{tpu_custom_call.1} parent=35 // pred_check_branch
          %247 = sbr.rel (%p245) target = $region40
        $region39: #{tpu_custom_call.1} parent=35 // pred_region
          %249 = dma.done [#allocation3], 128
        $region40: #{tpu_custom_call.1} parent=35 // pred_fallthru
          _
        %s250 = sand.u32 %s25, 1
        %s251 = scalar_lea.sflag [#allocation6], %s250
        %s252 = sand.u32 %s54, 1
        %s253 = smul.addr %s252, 128
        %s254 = scalar_lea.vmem [#allocation5], %s253
        // Predicated region
        $region41: #{tpu_custom_call.1} parent=35 // pred_check
          %p255 = pneg %p67
        $region42: #{tpu_custom_call.1} parent=35 // pred_check_branch
          %257 = sbr.rel (%p255) target = $region44
        $region43: #{tpu_custom_call.1} parent=35 // pred_region
          %259 = dma.done %s251, 2048
        $region44: #{tpu_custom_call.1} parent=35 // pred_fallthru
          _
        %s260 = sand.u32 %s25, 1
        %s261 = scalar_lea.sflag [#allocation6], %s260
        %s262 = sand.u32 %s80, 1
        %s263 = smul.addr %s262, 2
        %s264 = scalar_lea.vmem [#allocation7], %s263
        // Predicated region
        $region45: #{tpu_custom_call.1} parent=35 // pred_check
          %p265 = pneg %p93
        $region46: #{tpu_custom_call.1} parent=35 // pred_check_branch
          %267 = sbr.rel (%p265) target = $region48
        $region47: #{tpu_custom_call.1} parent=35 // pred_region
          %269 = dma.done %s261, 32
        $region48: #{tpu_custom_call.1} parent=35 // pred_fallthru
          _
        %s270 = sand.u32 %s106, 1
        %s271 = scalar_lea.sflag [#allocation9], %s270
        %s272 = sand.u32 %s106, 1
        %s273 = smul.addr %s272, 2
        %s274 = scalar_lea.vmem [#allocation8], %s273
        // Predicated region
        $region49: #{tpu_custom_call.1} parent=35 // pred_check
          %p275 = pneg %p119
        $region50: #{tpu_custom_call.1} parent=35 // pred_check_branch
          %277 = sbr.rel (%p275) target = $region52
        $region51: #{tpu_custom_call.1} parent=35 // pred_region
          %279 = dma.done %s271, 32
        $region52: #{tpu_custom_call.1} parent=35 // pred_fallthru
          _
        %p280 = pneg %p41
        %p281 = pneg %p38
        %s282 = sand.u32 %s25, 1
        %s283 = scalar_lea.sflag [#allocation6], %s282
        %s284 = sand.u32 %s54, 1
        %s285 = smul.addr %s284, 128
        %s286 = scalar_lea.vmem [#allocation5], %s285
        %p287 = pneg %p67
        %p288 = pneg %p64
        %s289 = sand.u32 %s25, 1
        %s290 = scalar_lea.sflag [#allocation6], %s289
        %s291 = sand.u32 %s80, 1
        %s292 = smul.addr %s291, 2
        %s293 = scalar_lea.vmem [#allocation7], %s292
        %p294 = pneg %p93
        %p295 = pneg %p90
        %s296 = sand.u32 %s106, 1
        %s297 = scalar_lea.sflag [#allocation9], %s296
        %s298 = sand.u32 %s106, 1
        %s299 = smul.addr %s298, 2
        %s300 = scalar_lea.vmem [#allocation8], %s299
        %p301 = pneg %p119
        %p302 = pneg %p116
        %p303 = pneg %p145
        %p304 = pneg %p142
        %s305 = sand.u32 %s132, 1
        %s306 = scalar_lea.sflag [#allocation4], %s305
        %s307 = sand.u32 %s132, 1
        %s308 = smul.addr %s307, 16
        %s309 = scalar_lea.vmem [#allocation10], %s308
        %s310 = smul.u32 2, %s25
        %s311 = smul.u32 2, %s25
        %s312 = smul.u32 2, %s25
        %s313 = smul.u32 2, %s25
        %v314 = vld [vmem:[#allocation2] sm:$0xf]
        %v315 = vld [vmem:[#allocation2 + $0x4] sm:$0xf]
        %v316 = vld [vmem:[%s254] sm:$0xff]
        %v317 = vld [vmem:[%s254 + $0x8] sm:$0xff]
        %v318 = vld [vmem:[%s254 + $0x10] sm:$0xff]
        %v319 = vld [vmem:[%s254 + $0x18] sm:$0xff]
        %v320 = vld [vmem:[%s254 + $0x20] sm:$0xff]
        %v321 = vld [vmem:[%s254 + $0x28] sm:$0xff]
        %v322 = vld [vmem:[%s254 + $0x30] sm:$0xff]
        %v323 = vld [vmem:[%s254 + $0x38] sm:$0xff]
        %v324 = vld [vmem:[%s254 + $0x40] sm:$0xff]
        %v325 = vld [vmem:[%s254 + $0x48] sm:$0xff]
        %v326 = vld [vmem:[%s254 + $0x50] sm:$0xff]
        %v327 = vld [vmem:[%s254 + $0x58] sm:$0xff]
        %v328 = vld [vmem:[%s254 + $0x60] sm:$0xff]
        %v329 = vld [vmem:[%s254 + $0x68] sm:$0xff]
        %v330 = vld [vmem:[%s254 + $0x70] sm:$0xff]
        %v331 = vld [vmem:[%s254 + $0x78] sm:$0xff]
        %v334 = vunpack.c.l.b16 %v314
        %v335 = vunpack.c.l.b16 %v315
        %v336 = vpack.c.b16 %v335, %v334
        %v354 = vunpack.c.l.b16 %v316
        %v355 = vunpack.c.h.b16 %v316
        %v356 = vunpack.c.l.b16 %v317
        %v357 = vunpack.c.h.b16 %v317
        %v358 = vunpack.c.l.b16 %v318
        %v359 = vunpack.c.h.b16 %v318
        %v360 = vunpack.c.l.b16 %v319
        %v361 = vunpack.c.h.b16 %v319
        %v362 = vunpack.c.l.b16 %v320
        %v363 = vunpack.c.h.b16 %v320
        %v364 = vunpack.c.l.b16 %v321
        %v365 = vunpack.c.h.b16 %v321
        %v366 = vunpack.c.l.b16 %v322
        %v367 = vunpack.c.h.b16 %v322
        %v368 = vunpack.c.l.b16 %v323
        %v369 = vunpack.c.h.b16 %v323
        %v370 = vunpack.c.l.b16 %v324
        %v371 = vunpack.c.h.b16 %v324
        %v372 = vunpack.c.l.b16 %v325
        %v373 = vunpack.c.h.b16 %v325
        %v374 = vunpack.c.l.b16 %v326
        %v375 = vunpack.c.h.b16 %v326
        %v376 = vunpack.c.l.b16 %v327
        %v377 = vunpack.c.h.b16 %v327
        %v378 = vunpack.c.l.b16 %v328
        %v379 = vunpack.c.h.b16 %v328
        %v380 = vunpack.c.l.b16 %v329
        %v381 = vunpack.c.h.b16 %v329
        %v382 = vunpack.c.l.b16 %v330
        %v383 = vunpack.c.h.b16 %v330
        %v384 = vunpack.c.l.b16 %v331
        %v385 = vunpack.c.h.b16 %v331
        %v386 = vpack.c.b16 %v356, %v354
        %v387 = vpack.c.b16 %v357, %v355
        %v388 = vpack.c.b16 %v360, %v358
        %v389 = vpack.c.b16 %v361, %v359
        %v390 = vpack.c.b16 %v364, %v362
        %v391 = vpack.c.b16 %v365, %v363
        %v392 = vpack.c.b16 %v368, %v366
        %v393 = vpack.c.b16 %v369, %v367
        %v394 = vpack.c.b16 %v372, %v370
        %v395 = vpack.c.b16 %v373, %v371
        %v396 = vpack.c.b16 %v376, %v374
        %v397 = vpack.c.b16 %v377, %v375
        %v398 = vpack.c.b16 %v380, %v378
        %v399 = vpack.c.b16 %v381, %v379
        %v400 = vpack.c.b16 %v384, %v382
        %v401 = vpack.c.b16 %v385, %v383
        %418 = vmatpush.bf16.msra.mxu0 %v400
        %419 = vmatpush.bf16.msra.mxu0 %v398
        %420 = vmatpush.bf16.msra.mxu0 %v396
        %421 = vmatpush.bf16.msra.mxu0 %v394
        %422 = vmatpush.bf16.msra.mxu0 %v392
        %423 = vmatpush.bf16.msra.mxu0 %v390
        %424 = vmatpush.bf16.msra.mxu0 %v388
        %425 = vmatpush.bf16.msra.mxu0 %v386
        %426 = vmatmul.bf16.gmra.mxu0 %v336
        %v427 = vpop.f32.mrf.mxu0
        %v428 = vadd.f32 0.0, %v427
        %v429 = vpop.f32.mrf.mxu0
        %v430 = vadd.f32 0.0, %v429
        %431 = vdwg.mxu0
        %432 = vmatpush.bf16.msra.mxu0 %v401
        %433 = vmatpush.bf16.msra.mxu0 %v399
        %434 = vmatpush.bf16.msra.mxu0 %v397
        %435 = vmatpush.bf16.msra.mxu0 %v395
        %436 = vmatpush.bf16.msra.mxu0 %v393
        %437 = vmatpush.bf16.msra.mxu0 %v391
        %438 = vmatpush.bf16.msra.mxu0 %v389
        %439 = vmatpush.bf16.msra.mxu0 %v387
        %440 = vmatmul.bf16.gmra.mxu0 %v336
        %v441 = vpop.f32.mrf.mxu0
        %v442 = vadd.f32 0.0, %v441
        %v443 = vpop.f32.mrf.mxu0
        %v444 = vadd.f32 0.0, %v443
        %445 = vdwg.mxu0
        %v446 = vadd.f32 %v428, %v430
        %v447 = vrot.slane %v446, 4
        %v448 = vadd.f32 %v446, %v447
        %v449 = vrot.slane %v448, 2
        %v450 = vadd.f32 %v448, %v449
        %v451 = vrot.slane %v450, 1
        %v452 = vadd.f32 %v450, %v451
        %v453 = vadd.f32 %v442, %v444
        %v454 = vrot.slane %v453, 4
        %v455 = vadd.f32 %v453, %v454
        %v456 = vrot.slane %v455, 2
        %v457 = vadd.f32 %v455, %v456
        %v458 = vrot.slane %v457, 1
        %v459 = vadd.f32 %v457, %v458
        %v460 = vmul.f32 %v428, %v428
        %v461 = vmul.f32 %v442, %v442
        %v462 = vmul.f32 %v430, %v430
        %v463 = vmul.f32 %v444, %v444
        %v464 = vadd.f32 %v460, %v462
        %v465 = vrot.slane %v464, 4
        %v466 = vadd.f32 %v464, %v465
        %v467 = vrot.slane %v466, 2
        %v468 = vadd.f32 %v466, %v467
        %v469 = vrot.slane %v468, 1
        %v470 = vadd.f32 %v468, %v469
        %v471 = vadd.f32 %v461, %v463
        %v472 = vrot.slane %v471, 4
        %v473 = vadd.f32 %v471, %v472
        %v474 = vrot.slane %v473, 2
        %v475 = vadd.f32 %v473, %v474
        %v476 = vrot.slane %v475, 1
        %v477 = vadd.f32 %v475, %v476
        %v478 = vmul.f32 %v452, 0.0625
        %v479 = vmul.f32 %v459, 0.0625
        %v480 = vmul.f32 %v470, 0.0625
        %v481 = vmul.f32 %v477, 0.0625
        %v482 = vmul.f32 %v478, %v478
        %v483 = vmul.f32 %v479, %v479
        %v484 = vsub.f32 %v480, %v482
        %v485 = vsub.f32 %v481, %v483
        %v486 = vmax.f32 %v484, 0.0
        %v487 = vmax.f32 %v485, 0.0
        %v488 = vld [vmem:[%s264] sm:$0x3]
        %v489 = vadd.f32 %v486, 1e-05
        %v490 = vadd.f32 %v487, 1e-05
        %v491 = vrsqrt.pop %v489
        %v492 = vmul.f32 %v491, %v489
        %v493 = vmul.f32 %v492, %v491
        %v494 = vmul.f32 0.5, %v493
        %v495 = vsub.f32 1.5, %v494
        %v496 = vmul.f32 %v491, %v495
        %vm497 = vweird.f32 %v489
        %vm498 = vweird.f32 %v491
        %vm499 = vmor %vm497, %vm498
        %v500 = vsel %vm499, %v491, %v496
        %v501 = vrsqrt.pop %v490
        %v502 = vmul.f32 %v501, %v490
        %v503 = vmul.f32 %v502, %v501
        %v504 = vmul.f32 0.5, %v503
        %v505 = vsub.f32 1.5, %v504
        %v506 = vmul.f32 %v501, %v505
        %vm507 = vweird.f32 %v490
        %vm508 = vweird.f32 %v501
        %vm509 = vmor %vm507, %vm508
        %v510 = vsel %vm509, %v501, %v506
        %v513 = vrot.slane %v510, 7
        %vm514 = vcmask 1040384
        %v515 = vsel %vm514, %v500, %v513
        %v517 = vmul.f32 %v488, %v515
        %v518 = vld [vmem:[%s274] sm:$0x3]
        %v520 = vperm.slane %v517, 0
        %v521 = vperm.slane %v517, 1
        %v524 = vmul.f32 %v478, %v520
        %v525 = vmul.f32 %v479, %v521
        %v528 = vrot.slane %v525, 7
        %v529 = vsel %vm514, %v524, %v528
        %v531 = vsub.f32 %v518, %v529
        %v532 = vmul.f32 %v428, %v520
        %v533 = vmul.f32 %v442, %v521
        %v534 = vmul.f32 %v430, %v520
        %v535 = vmul.f32 %v444, %v521
        %v537 = vperm.slane %v531, 0
        %v538 = vperm.slane %v531, 1
        %v541 = vadd.f32 %v532, %v537
        %v542 = vadd.f32 %v533, %v538
        %v543 = vadd.f32 %v534, %v537
        %v544 = vadd.f32 %v535, %v538
        %v545 = vmax.f32 %v541, 0.0
        %v546 = vmax.f32 %v542, 0.0
        %v547 = vmax.f32 %v543, 0.0
        %v548 = vmax.f32 %v544, 0.0
        %v549 = vpack.c.bf16 %v546, %v545
        %v550 = vpack.c.bf16 %v548, %v547
        %551 = vst [vmem:[%s309] sm:$0xff] %v549
        %552 = vst [vmem:[%s309 + $0x8] sm:$0xff] %v550
        %s553 = sand.u32 %s132, 1
        %s554 = scalar_lea.sflag [#allocation4], %s553
        %s555 = sand.u32 %s132, 1
        %s556 = smul.addr %s555, 16
        %s557 = scalar_lea.vmem [#allocation10], %s556
        // Predicated region
        $region53: #{tpu_custom_call.1} parent=35 // pred_check
          %p558 = pneg %p142
        $region54: #{tpu_custom_call.1} parent=35 // pred_check_branch
          %560 = sbr.rel (%p558) target = $region56
        $region55: #{tpu_custom_call.1} parent=35 // pred_region
          %s561 = smul.u32 2, %s25
          %563 = vsyncadd %s554, 0
          %s564 = smul.addr %s561, 4
          %s565 = scalar_lea.hbm %s4, %s564
          %s566 = sshll.u32 %s557, 4
          %s567 = int_to_ptr.vmem [resolvable:$true] %s566
          %s568 = sshll.u32 %s565, 4
          %s569 = int_to_ptr.hbm [resolvable:$true] %s568
          %574 = dma.vmem_to_hbm [thread:$0]  %s567, 256, %s569, %s554, 128, 256, 8
        $region56: #{tpu_custom_call.1} parent=35 // pred_fallthru
          _
      $region36: #{tpu_custom_call.1} parent=5 // pred_fallthru
        _
      %p575 = scmp.le.s32.totalorder 2, %s20
      // Predicated region
      $region57: #{tpu_custom_call.1} parent=5 // pred_check
        %p576 = pneg %p575
      $region58: #{tpu_custom_call.1} parent=5 // pred_check_branch
        %578 = sbr.rel (%p576) target = $region60
      $region59: #{tpu_custom_call.1} parent=5 // pred_region
        %s579 = ssub.s32 %s20, 2
        // Predicated region
        $region61: #{tpu_custom_call.1} parent=59 // pred_check
          %p580 = pneg %p148
        $region62: #{tpu_custom_call.1} parent=59 // pred_check_branch
          %582 = sbr.rel (%p580) target = $region64
        $region63: #{tpu_custom_call.1} parent=59 // pred_region
          %s583 = sand.u32 %s133, 1
          %s584 = scalar_lea.sflag [#allocation4], %s583
          %s585 = sand.u32 %s133, 1
          %s586 = smul.addr %s585, 16
          %s587 = scalar_lea.vmem [#allocation10], %s586
          %589 = dma.done %s584, 256
        $region64: #{tpu_custom_call.1} parent=59 // pred_fallthru
          _
      $region60: #{tpu_custom_call.1} parent=5 // pred_fallthru
        _
    $region6: #{tpu_custom_call.1} parent=1 // loop_footer
      %s24 = sadd.s32 1, %s20
    $region7: #{tpu_custom_call.1} parent=1 // loop_footer_branch
      %19 = sbr.rel target = $region3
    $region8: #{tpu_custom_call.1} parent=1 // loop_exit
      _
    %590 = vsyncpa [#allocation3], 1
    %s591 = scalar_lea.sflag [#allocation3], 1
    %592 = vsyncpa %s591, 1
    %593 = vsyncpa [#allocation6], 1
    %s594 = scalar_lea.sflag [#allocation6], 1
    %595 = vsyncpa %s594, 1
    %596 = vsyncpa [#allocation9], 1
    %s597 = scalar_lea.sflag [#allocation9], 1
    %598 = vsyncpa %s597, 1
    %599 = vsyncpa [#allocation4], 1
    %s600 = scalar_lea.sflag [#allocation4], 1
    %601 = vsyncpa %s600, 1

</llo_original>
